<compile_context>
chip_gen: v7x
topology: tpu7x:2x2x1
jax: 0.10.0
libtpu: 0.0.40
codegen_flags: <defaults>
</compile_context>

<pallas_src>
import jax
import jax.numpy as jnp
from jax.experimental import pallas as pl
from jax.experimental.pallas import tpu as pltpu


def _round_up(v, m):
    return ((v + m - 1) // m) * m


def _classifier_kernel(x_ref, w_ref, b_ref, o_ref):
    # x_ref: (TB, D) f32, w_ref: (D, Npad) f32, b_ref: (1, Npad) f32, o_ref: (TB, Npad)
    logits = jnp.dot(x_ref[...], w_ref[...], preferred_element_type=jnp.float32)
    logits = logits + b_ref[...]                      # broadcast (1, Npad) over rows
    # numerically stable log-softmax along the class axis; padded classes carry a
    # -1e30 bias -> never the max, exp -> 0, so they don't affect the denominator.
    m = jnp.max(logits, axis=-1, keepdims=True)
    shifted = logits - m
    lse = jnp.log(jnp.sum(jnp.exp(shifted), axis=-1, keepdims=True))
    o_ref[...] = (shifted - lse).astype(o_ref.dtype)


def prepare_params(w, b):
    """One-time parameter prep (call at init, NOT per forward step).

    Pads the class axis up to a multiple of 128 for lane-dense stores / MXU-aligned
    N. Padded classes get bias -1e30 so they vanish from the softmax.
    Returns (w_padded (D, N_pad), b_padded (1, N_pad), nclass).
    """
    D, N = w.shape
    N_pad = _round_up(N, 128)
    if N_pad != N:
        w_p = jnp.pad(w, ((0, 0), (0, N_pad - N)))
        b_p = jnp.pad(b, (0, N_pad - N), constant_values=-1e30)
    else:
        w_p, b_p = w, b
    return w_p, b_p.reshape(1, N_pad), N


def classifier_forward(x, w_p, b_p, nclass, *, tb=512, out_dtype=jnp.float32,
                       trim=True, vmem_budget_bytes=12 << 20):
    """x: (B, D) f32, w_p: (D, N_pad) f32, b_p: (1, N_pad) f32 -> log-probs.

    trim=True  -> (B, nclass) (matches the PyTorch module exactly; costs a slice copy)
    trim=False -> (B_pad, N_pad) padded output; consumer should ignore pad rows/cols.
    """
    B, D = x.shape
    Dw, N_pad = w_p.shape
    assert D == Dw and N_pad % 128 == 0 and b_p.shape == (1, N_pad)

    out_itemsize = jnp.dtype(out_dtype).itemsize

    # --- batch tile: aim for >= 4 grid steps (megacore + pipeline overlap),
    #     multiple of 8 (f32 sublane), bounded by the VMEM budget. ---------------
    tb_steps = _round_up(max(1, -(-B // 4)), 8)            # cdiv(B, 4), 8-aligned
    TB = max(8, min((int(tb) // 8) * 8, tb_steps))

    resident = 4 * D * N_pad + 4 * N_pad                   # single-buffered W + bias
    per_row_2buf = 2 * (4 * D + out_itemsize * N_pad)      # double-buffered x + out
    # TODO(synk): if D were so large that W alone blows the VMEM budget, this kernel
    # would need a K-tiled reduction grid; not needed for this module's sizes.
    tb_vmem = max(8, ((vmem_budget_bytes - resident) // max(per_row_2buf, 1)) // 8 * 8)
    TB = max(8, min(TB, tb_vmem))

    B_pad = _round_up(B, TB)
    x_p = jnp.pad(x, ((0, B_pad - B), (0, 0))) if B_pad != B else x
    steps = B_pad // TB

    # deeper buffering on the streamed tiles once the grid is long enough
    per_row_1buf = 4 * D + out_itemsize * N_pad
    io_bufs = 3 if (steps >= 8 and resident + 3 * TB * per_row_1buf <= vmem_budget_bytes) else 2

    vmem_used = resident + io_bufs * TB * per_row_1buf
    vmem_limit = int(min(32 << 20, max(2 * vmem_used, 16 << 20)))

    cost = pl.CostEstimate(
        flops=2 * B_pad * D * N_pad,
        transcendentals=B_pad * N_pad + B_pad,              # exp per element + log per row
        bytes_accessed=4 * (B_pad * D + D * N_pad + N_pad)
                       + out_itemsize * B_pad * N_pad,
    )

    out = pl.pallas_call(
        _classifier_kernel,
        out_shape=jax.ShapeDtypeStruct((B_pad, N_pad), out_dtype),
        grid_spec=pltpu.PrefetchScalarGridSpec(
            num_scalar_prefetch=0,
            grid=(steps,),
            in_specs=[
                pl.BlockSpec((TB, D), lambda i: (i, 0),
                             pipeline_mode=pl.Buffered(io_bufs)),   # streamed x tiles
                pl.BlockSpec((D, N_pad), lambda i: (0, 0),
                             pipeline_mode=pl.Buffered(1)),         # resident weights
                pl.BlockSpec((1, N_pad), lambda i: (0, 0),
                             pipeline_mode=pl.Buffered(1)),         # resident bias
            ],
            out_specs=pl.BlockSpec((TB, N_pad), lambda i: (i, 0),
                                   pipeline_mode=pl.Buffered(io_bufs)),
        ),
        compiler_params=pltpu.CompilerParams(
            dimension_semantics=("parallel",),   # batch tiles are independent
            vmem_limit_bytes=vmem_limit,
        ),
        cost_estimate=cost,
    )(x_p, w_p, b_p)

    if trim:
        # NOTE: this slice materializes a copy of the logits; pass trim=False and
        # let the consumer ignore the pad rows/cols to avoid the extra HBM traffic.
        return out[:B, :nclass]
    return out


if __name__ == "__main__":
    key = jax.random.PRNGKey(0)
    kx, kw, kb, kx2 = jax.random.split(key, 4)

    B, input_dim, nclass = 8, 32, 200   # fc1 output is fixed at 200 by the module
    bound = 1.0 / (input_dim ** 0.5)    # nn.Linear default init: U(-1/sqrt(in), 1/sqrt(in))
    x = jax.random.normal(kx, (B, input_dim), jnp.float32)
    w = jax.random.uniform(kw, (input_dim, nclass), jnp.float32, -bound, bound)
    b = jax.random.uniform(kb, (nclass,), jnp.float32, -bound, bound)

    # one-time padding, hoisted out of the forward path
    w_p, b_p, n = prepare_params(w, b)

    out = jax.block_until_ready(classifier_forward(x, w_p, b_p, n))
    ref = jax.nn.log_softmax(x @ w + b, axis=1)
    assert out.shape == (B, nclass)
    assert jnp.allclose(out, ref, atol=1e-5, rtol=1e-5)

    # multi-step grid (megacore sharding + pipelining) and untrimmed padded output
    B2 = 300
    x2 = jax.random.normal(kx2, (B2, input_dim), jnp.float32)
    out2 = jax.block_until_ready(
        classifier_forward(x2, w_p, b_p, n, tb=128, trim=False))
    ref2 = jax.nn.log_softmax(x2 @ w + b, axis=1)
    assert jnp.allclose(out2[:B2, :nclass], ref2, atol=1e-5, rtol=1e-5)

    # bf16 log-prob output (halves the dominant HBM writeback traffic)
    out3 = jax.block_until_ready(
        classifier_forward(x2, w_p, b_p, n, out_dtype=jnp.bfloat16))
    assert out3.shape == (B2, nclass) and out3.dtype == jnp.bfloat16
    assert jnp.allclose(out3.astype(jnp.float32), ref2, atol=3e-2, rtol=3e-2)

    print("KERNEL_OK")
</pallas_src>

<mosaic_0001>
module attributes {stable_mosaic.version = 11 : i64} {
  func.func @_classifier_kernel(%arg0: i32, %arg1: memref<8x32xf32, #tpu.memory_space<vmem>>, %arg2: memref<32x256xf32, #tpu.memory_space<vmem>>, %arg3: memref<1x256xf32, #tpu.memory_space<vmem>>, %arg4: memref<8x256xf32, #tpu.memory_space<vmem>>) attributes {dimension_semantics = [#tpu.dimension_semantics<parallel>], iteration_bounds = array<i64: 1>, scalar_prefetch = 0 : i64, scratch_operands = 0 : i64, tpu.core_type = #tpu.core_type<tc>, window_params = [{pipeline_mode = #tpu.pipeline_mode<double_buffered>, transform_indices = @transform_0, window_bounds = array<i64: 8, 32>}, {pipeline_mode = #tpu.pipeline_mode<synchronous>, transform_indices = @transform_1, window_bounds = array<i64: 32, 256>}, {pipeline_mode = #tpu.pipeline_mode<synchronous>, transform_indices = @transform_2, window_bounds = array<i64: 1, 256>}, {pipeline_mode = #tpu.pipeline_mode<double_buffered>, transform_indices = @transform_3, window_bounds = array<i64: 8, 256>}]} {
    %c0 = arith.constant 0 : index
    %c0_0 = arith.constant 0 : index
    %0 = vector.load %arg1[%c0, %c0_0] : memref<8x32xf32, #tpu.memory_space<vmem>>, vector<8x32xf32>
    %c0_1 = arith.constant 0 : index
    %c0_2 = arith.constant 0 : index
    %1 = vector.load %arg2[%c0_1, %c0_2] : memref<32x256xf32, #tpu.memory_space<vmem>>, vector<32x256xf32>
    %cst = arith.constant dense<0.000000e+00> : vector<8x256xf32>
    %2 = tpu.matmul %0, %1, %cst {dimension_numbers = #tpu.dot_dimension_numbers<[1], [0], [0], [1], [0, 0, 1, 1], [], []>} : vector<8x32xf32>, vector<32x256xf32>, vector<8x256xf32> -> vector<8x256xf32>
    %c0_3 = arith.constant 0 : index
    %c0_4 = arith.constant 0 : index
    %3 = vector.load %arg3[%c0_3, %c0_4] : memref<1x256xf32, #tpu.memory_space<vmem>>, vector<1x256xf32>
    %4 = vector.broadcast %3 : vector<1x256xf32> to vector<8x256xf32>
    %5 = arith.addf %2, %4 : vector<8x256xf32>
    %cst_5 = arith.constant dense<0xFF800000> : vector<8xf32>
    %6 = vector.multi_reduction <maximumf>, %5, %cst_5 [1] : vector<8x256xf32> to vector<8xf32>
    %7 = vector.shape_cast %6 : vector<8xf32> to vector<8x1xf32>
    %8 = vector.broadcast %7 : vector<8x1xf32> to vector<8x256xf32>
    %9 = arith.subf %5, %8 : vector<8x256xf32>
    %10 = math.exp %9 : vector<8x256xf32>
    %cst_6 = arith.constant dense<0.000000e+00> : vector<8xf32>
    %11 = vector.multi_reduction <add>, %10, %cst_6 [1] : vector<8x256xf32> to vector<8xf32>
    %12 = vector.shape_cast %11 : vector<8xf32> to vector<8x1xf32>
    %13 = math.log %12 : vector<8x1xf32>
    %14 = vector.broadcast %13 : vector<8x1xf32> to vector<8x256xf32>
    %15 = arith.subf %9, %14 : vector<8x256xf32>
    %c0_7 = arith.constant 0 : index
    %c0_8 = arith.constant 0 : index
    %16 = vector.load %arg4[%c0_7, %c0_8] : memref<8x256xf32, #tpu.memory_space<vmem>>, vector<8x256xf32>
    tpu.vector_store %arg4[%c0_7, %c0_8], %15 {strides = array<i32>} : memref<8x256xf32, #tpu.memory_space<vmem>>, vector<8x256xf32>,
    return
  }
  func.func @transform_0(%arg0: i32) -> (i32, i32) {
    %c0_i32 = arith.constant 0 : i32
    %c0_i32_0 = arith.constant 0 : i32
    return %arg0, %c0_i32 : i32, i32
  }
  func.func @transform_1(%arg0: i32) -> (i32, i32) {
    %c0_i32 = arith.constant 0 : i32
    %c0_i32_0 = arith.constant 0 : i32
    %c0_i32_1 = arith.constant 0 : i32
    return %c0_i32, %c0_i32_0 : i32, i32
  }
  func.func @transform_2(%arg0: i32) -> (i32, i32) {
    %c0_i32 = arith.constant 0 : i32
    %c0_i32_0 = arith.constant 0 : i32
    %c0_i32_1 = arith.constant 0 : i32
    return %c0_i32, %c0_i32_0 : i32, i32
  }
  func.func @transform_3(%arg0: i32) -> (i32, i32) {
    %c0_i32 = arith.constant 0 : i32
    %c0_i32_0 = arith.constant 0 : i32
    return %arg0, %c0_i32 : i32, i32
  }
}

</mosaic_0001>

<llo_original>
// kernel: tpu_custom_call.1
$region0: #{tpu_custom_call.1}
  #allocation0 [shape = 'u32[]', space=smem, size = 0x4, offset = 0x4, fixed_abs, tag = 'smem constant byte address 0x4 - core index']
  #allocation1 [shape = 'u32[144,128]{1,0:T(1,128)}', space=vmem, size = 0x12000, scoped, tag = 'internal scratch']
  %s0 = inlined_call_operand.hbm [shape: f32[8,32], index: 0, kind: input, shape index: {}]
  %s1 = inlined_call_operand.hbm [shape: f32[32,256], index: 1, kind: input, shape index: {}]
  %s2 = inlined_call_operand.vmem [shape: f32[1,256], index: 2, kind: input, shape index: {}]
  %s3 = inlined_call_operand.hbm [shape: f32[8,256], index: 3, kind: output, shape index: {}]
  %s4 = sld [smem:[#allocation0]]
  $region30: #{tpu_custom_call.1} parent=0
    _
  %s6 = ssub.s32 1, %s4
  %s7 = scalar_select 0, %s6, %s4
  $region1: #{tpu_custom_call.1} parent=0
    #allocation2 [shape = 'u8[4096]{0}', space=vmem, size = 0x1000, scoped, tag = 'input window, operand 0, single buffered']
    #allocation3 [shape = 's32[1]{0}', space=sflag, size = 0x4, scoped, tag = 'scoped memory for tpu_custom_call.1']
    #allocation4 [shape = 's32[1]{0}', space=sflag, size = 0x4, scoped, tag = 'scoped memory for tpu_custom_call.1']
    #allocation5 [shape = 'u8[32768]{0}', space=vmem, size = 0x8000, scoped, tag = 'input window, operand 1, single buffered']
    #allocation6 [shape = 's32[1]{0}', space=sflag, size = 0x4, scoped, tag = 'scoped memory for tpu_custom_call.1']
    #allocation7 [shape = 'u8[8192]{0}', space=vmem, size = 0x2000, scoped, tag = 'output window, operand 0, single buffered']
    %8 = vsyncpa [#allocation3], 0
    %9 = vsyncpa [#allocation6], 0
    %10 = vsyncpa [#allocation4], 0
    // Predicated region
    $region2: #{tpu_custom_call.1} parent=1 // pred_check
      _
    $region3: #{tpu_custom_call.1} parent=1 // pred_check_branch
      %12 = sbr.rel (0) target = $region5
    $region4: #{tpu_custom_call.1} parent=1 // pred_region
      %s14 = ssub.s32 128, 128
      %15 = vsyncadd [#allocation3], %s14
      %s17 = sshll.u32 [#allocation2], 4
      %s18 = int_to_ptr.vmem [resolvable:$true] %s17
      %20 = dma.hbm_to_vmem [thread:$0]  %s0, 128, %s18, [#allocation3]
    $region5: #{tpu_custom_call.1} parent=1 // pred_fallthru
      _
    // Predicated region
    $region6: #{tpu_custom_call.1} parent=1 // pred_check
      _
    $region7: #{tpu_custom_call.1} parent=1 // pred_check_branch
      %22 = sbr.rel (0) target = $region9
    $region8: #{tpu_custom_call.1} parent=1 // pred_region
      %s24 = ssub.s32 1024, 1024
      %25 = vsyncadd [#allocation6], %s24
      %s26 = sshll.u32 [#allocation5], 4
      %s27 = int_to_ptr.vmem [resolvable:$true] %s26
      %32 = dma.hbm_to_vmem [thread:$0]  %s1, 1024, %s27, [#allocation6], 256, 256, 16
    $region9: #{tpu_custom_call.1} parent=1 // pred_fallthru
      _
    // Predicated region
    $region10: #{tpu_custom_call.1} parent=1 // pred_check
      _
    $region11: #{tpu_custom_call.1} parent=1 // pred_check_branch
      %34 = sbr.rel (0) target = $region13
    $region12: #{tpu_custom_call.1} parent=1 // pred_region
      _
    $region13: #{tpu_custom_call.1} parent=1 // pred_fallthru
      _
    // Predicated region
    $region14: #{tpu_custom_call.1} parent=1 // pred_check
      _
    $region15: #{tpu_custom_call.1} parent=1 // pred_check_branch
      %36 = sbr.rel (0) target = $region17
    $region16: #{tpu_custom_call.1} parent=1 // pred_region
      %37 = dma.done [#allocation3], 128
    $region17: #{tpu_custom_call.1} parent=1 // pred_fallthru
      _
    // Predicated region
    $region18: #{tpu_custom_call.1} parent=1 // pred_check
      _
    $region19: #{tpu_custom_call.1} parent=1 // pred_check_branch
      %39 = sbr.rel (0) target = $region21
    $region20: #{tpu_custom_call.1} parent=1 // pred_region
      %40 = dma.done [#allocation6], 1024
    $region21: #{tpu_custom_call.1} parent=1 // pred_fallthru
      _
    %v41 = vld [vmem:[#allocation2] sm:$0xff]
    %v42 = vld [vmem:[#allocation5] sm:$0xff]
    %v43 = vld [vmem:[#allocation5 + $0x8] sm:$0xff]
    %v44 = vld [vmem:[#allocation5 + $0x10] sm:$0xff]
    %v45 = vld [vmem:[#allocation5 + $0x18] sm:$0xff]
    %v46 = vld [vmem:[#allocation5 + $0x20] sm:$0xff]
    %v47 = vld [vmem:[#allocation5 + $0x28] sm:$0xff]
    %v48 = vld [vmem:[#allocation5 + $0x30] sm:$0xff]
    %v49 = vld [vmem:[#allocation5 + $0x38] sm:$0xff]
    %v50 = vld [vmem:[%s2] sm:$0x3]
    %v52 = vlaneseq
    %v53 = vshrl.u32 %v52, 7
    %v54 = vsub.s32 0, %v53
    %v55 = vrot.slane %v50, %v54
    %v56 = vlaneseq
    %v57 = vshrl.u32 %v56, 7
    %v58 = vsub.s32 1, %v57
    %v59 = vrot.slane %v50, %v58
    %vm62 = vcmask 261120
    %v64 = vsel %vm62, %v41, 0
    %66 = vmatprep.subr.mxu0 %v43
    %67 = vmatpush1.msra.mxu0 %v42
    %68 = vmatprep.subr.mxu0 %v45
    %69 = vmatpush1.msra.mxu0 %v44
    %70 = vmatprep.subr.mxu0 %v47
    %71 = vmatpush1.msra.mxu0 %v46
    %72 = vmatprep.subr.mxu0 %v49
    %73 = vmatpush1.msra.mxu0 %v48
    %74 = vmatprep.subr.mxu0 0.0
    %75 = vmatpush1.msra.mxu0 0.0
    %76 = vmatprep.subr.mxu0 0.0
    %77 = vmatpush1.msra.mxu0 0.0
    %78 = vmatprep.subr.mxu0 0.0
    %79 = vmatpush1.msra.mxu0 0.0
    %80 = vmatprep.subr.mxu0 0.0
    %81 = vmatpush1.msra.mxu0 0.0
    %82 = vmatprep.subr.mxu0 0.0
    %83 = vmatpush1.msra.mxu0 0.0
    %84 = vmatprep.subr.mxu0 0.0
    %85 = vmatpush1.msra.mxu0 0.0
    %86 = vmatprep.subr.mxu0 0.0
    %87 = vmatpush1.msra.mxu0 0.0
    %88 = vmatprep.subr.mxu0 0.0
    %89 = vmatpush1.msra.mxu0 0.0
    %90 = vmatprep.subr.mxu0 0.0
    %91 = vmatpush1.msra.mxu0 0.0
    %92 = vmatprep.subr.mxu0 0.0
    %93 = vmatpush1.msra.mxu0 0.0
    %94 = vmatprep.subr.mxu0 0.0
    %95 = vmatpush1.msra.mxu0 0.0
    %96 = vmatprep.subr.mxu0 0.0
    %97 = vmatpush1.msra.mxu0 0.0
    %98 = vmatprep.subr.mxu0 0.0
    %99 = vmatpush1.msra.mxu0 0.0
    %100 = vmatprep.subr.mxu0 0.0
    %101 = vmatpush1.msra.mxu0 0.0
    %102 = vmatprep.subr.mxu0 0.0
    %103 = vmatpush1.msra.mxu0 0.0
    %104 = vmatprep.subr.mxu0 0.0
    %105 = vmatpush1.msra.mxu0 0.0
    %106 = vmatprep.subr.mxu0 0.0
    %107 = vmatpush1.msra.mxu0 0.0
    %108 = vmatprep.subr.mxu0 0.0
    %109 = vmatpush1.msra.mxu0 0.0
    %110 = vmatprep.subr.mxu0 0.0
    %111 = vmatpush1.msra.mxu0 0.0
    %112 = vmatprep.subr.mxu0 0.0
    %113 = vmatpush1.msra.mxu0 0.0
    %114 = vmatprep.subr.mxu0 0.0
    %115 = vmatpush1.msra.mxu0 0.0
    %116 = vmatprep.subr.mxu0 0.0
    %117 = vmatpush1.msra.mxu0 0.0
    %118 = vmatprep.subr.mxu0 0.0
    %119 = vmatpush1.msra.mxu0 0.0
    %120 = vmatprep.subr.mxu0 0.0
    %121 = vmatpush1.msra.mxu0 0.0
    %122 = vmatprep.subr.mxu0 0.0
    %123 = vmatpush1.msra.mxu0 0.0
    %124 = vmatprep.subr.mxu0 0.0
    %125 = vmatpush1.msra.mxu0 0.0
    %126 = vmatprep.subr.mxu0 0.0
    %127 = vmatpush1.msra.mxu0 0.0
    %128 = vmatprep.subr.mxu0 0.0
    %129 = vmatpush1.msra.mxu0 0.0
    %130 = vmatprep.mubr.f32.mxu0 0.0
    %131 = vmatmul.mubr.f32.gmra.mrb[0].mxu0 %v64
    %v132 = vpop.f32.mrb[0].mxu0
    %v133 = vadd.f32 %v55, %v132
    %v134 = vpop.f32.mrb[0].mxu0
    %v135 = vadd.f32 %v59, %v134
    %136 = vdwg.mxu0
    %v137 = vmax.f32 %v133, %v135
    %138 = vmax.xlane.f32.xlu0 %v137
    %v139 = vpop.xlane.xlu0 %138
    %v140 = vsub.f32 %v133, %v139
    %v141 = vsub.f32 %v135, %v139
    %v142 = vmul.f32 %v140, 1.442695
    %v143 = vpow.pop %v142
    %v144 = vmul.f32 %v141, 1.442695
    %v145 = vpow.pop %v144
    %v146 = vadd.f32 %v143, %v145
    %147 = vadd.xlane.f32.xlu0 %v146
    %v148 = vpop.xlane.xlu0 %147
    %v149 = vlog2.pop %v148
    %v150 = vmul.f32 %v149, 0.6931472
    %v151 = vsub.f32 %v140, %v150
    %v152 = vsub.f32 %v141, %v150
    %153 = vst [vmem:[#allocation7] sm:$0xff] %v151
    %154 = vst [vmem:[#allocation7 + $0x8] sm:$0xff] %v152
    // Predicated region
    $region22: #{tpu_custom_call.1} parent=1 // pred_check
      _
    $region23: #{tpu_custom_call.1} parent=1 // pred_check_branch
      %156 = sbr.rel (0) target = $region25
    $region24: #{tpu_custom_call.1} parent=1 // pred_region
      %s158 = ssub.s32 256, 256
      %159 = vsyncadd [#allocation4], %s158
      %s161 = sshll.u32 [#allocation7], 4
      %s162 = int_to_ptr.vmem [resolvable:$true] %s161
      %164 = dma.vmem_to_hbm [thread:$0]  %s162, 256, %s3, [#allocation4]
    $region25: #{tpu_custom_call.1} parent=1 // pred_fallthru
      _
    // Predicated region
    $region26: #{tpu_custom_call.1} parent=1 // pred_check
      _
    $region27: #{tpu_custom_call.1} parent=1 // pred_check_branch
      %166 = sbr.rel (0) target = $region29
    $region28: #{tpu_custom_call.1} parent=1 // pred_region
      %167 = dma.done [#allocation4], 256
    $region29: #{tpu_custom_call.1} parent=1 // pred_fallthru
      _
    %168 = vsyncpa [#allocation3], 1
    %169 = vsyncpa [#allocation6], 1
    %170 = vsyncpa [#allocation4], 1

</llo_original>
